<compile_context>
chip_gen: v6e
topology: v6e:2x2x1
jax: 0.10.0
libtpu: 0.0.40
codegen_flags: <defaults>
</compile_context>

<pallas_src>
import jax
import jax.numpy as jnp
from jax.experimental import pallas as pl
from jax.experimental.pallas import tpu as pltpu


def autopad(k, p=None):
    if p is None:
        p = k // 2 if isinstance(k, int) else [x // 2 for x in k]
    return p


def _round_up(x, m):
    return ((x + m - 1) // m) * m


def _make_single_step_kernel(apply_act):
    """Whole reduction in one grid step: matmul + BN + SiLU, direct store."""
    def kernel(p_ref, w_ref, scale_ref, bias_ref, o_ref):
        acc = jnp.dot(p_ref[...], w_ref[...], preferred_element_type=jnp.float32)
        y = acc * scale_ref[...] + bias_ref[...]
        if apply_act:
            # SiLU: exp on EUP, approx reciprocal on EUP slot (VALU stays free).
            y = y * pl.reciprocal(1.0 + jnp.exp(-y), approx=True)
        o_ref[...] = y.astype(o_ref.dtype)
    return kernel


def _make_multi_step_kernel(apply_act):
    """Reduction split over the last grid axis with an f32 VMEM accumulator."""
    def kernel(p_ref, w_ref, scale_ref, bias_ref, o_ref, acc_ref):
        kk = pl.program_id(2)

        @pl.when(kk == 0)
        def _():
            acc_ref[...] = jnp.zeros_like(acc_ref)

        acc_ref[...] += jnp.dot(
            p_ref[...], w_ref[...], preferred_element_type=jnp.float32
        )

        @pl.when(kk == pl.num_programs(2) - 1)
        def _():
            y = acc_ref[...] * scale_ref[...] + bias_ref[...]
            if apply_act:
                y = y * pl.reciprocal(1.0 + jnp.exp(-y), approx=True)
            o_ref[...] = y.astype(o_ref.dtype)
    return kernel


def conv_bn_silu(x, weight, gamma, beta, running_mean, running_var,
                 *, stride=1, padding=None, groups=1, eps=1e-5, act=True,
                 tm=512, compute_dtype=jnp.bfloat16):
    """Pallas equivalent of Conv.forward (eval mode).

    x:      [N, C1, H, W]   (NCHW, like PyTorch)
    weight: [C2, C1, K, K]  (OIHW, like PyTorch; bias=False)
    BN params are per-channel [C2]; running stats are folded into scale/bias.
    """
    assert groups == 1  # TODO(synk): grouped conv (g > 1) not implemented.
    n, c1, h, w = x.shape
    c2, c1w, kh, kw = weight.shape
    assert c1w == c1 and kh == kw
    k = kh
    s = stride
    p = autopad(k, padding)

    oh = (h + 2 * p - k) // s + 1
    ow = (w + 2 * p - k) // s + 1

    # ---- layout plumbing (outside the kernel): NHWC + im2col ----
    # Cast to the (bf16) compute dtype *before* the im2col so the materialized
    # patch matrix costs half the HBM bytes.
    x_nhwc = jnp.transpose(x, (0, 2, 3, 1)).astype(compute_dtype)
    x_pad = jnp.pad(x_nhwc, ((0, 0), (p, p), (p, p), (0, 0)))
    patches = []
    for i in range(k):
        for j in range(k):
            patches.append(
                jax.lax.slice(
                    x_pad,
                    (0, i, j, 0),
                    (n, i + (oh - 1) * s + 1, j + (ow - 1) * s + 1, c1),
                    (1, s, s, 1),
                )
            )
    # TODO(synk): this HBM-materialized im2col is the remaining K^2x traffic
    # blow-up; move the tap gather into the kernel for large inputs.
    patches = jnp.concatenate(patches, axis=-1)          # [N, OH, OW, K*K*C1]
    m = n * oh * ow
    kd = k * k * c1
    patches = patches.reshape(m, kd)

    # Weight -> [K, K, C1, C2] -> [K*K*C1, C2] to match patch ordering.
    w_flat = jnp.transpose(weight, (2, 3, 1, 0)).reshape(kd, c2)
    w_flat = w_flat.astype(compute_dtype)

    # Fold BatchNorm (inference) into per-output-channel scale / bias (f32).
    scale = (gamma / jnp.sqrt(running_var + eps)).astype(jnp.float32)
    bias = (beta - running_mean * scale).astype(jnp.float32)

    # ---- tile selection (generation-aware VMEM budget, lane-dense blocks) ----
    # N tile: cover all of C2 when it fits -> the patches operand is streamed
    # from HBM exactly once (no redundant re-reads per output-channel tile).
    c2_128 = _round_up(c2, 128)
    tn = c2_128 if c2_128 <= 1024 else 512
    c2_pad = _round_up(c2, tn)

    # K tile: whole reduction in one grid step when it fits in VMEM.
    kd_128 = _round_up(kd, 128)
    single_k = kd_128 <= 2048
    tk = kd_128 if single_k else 1024
    kd_pad = _round_up(kd, tk)

    # M tile: large, but do not over-pad tiny inputs.
    tm = min(tm, _round_up(m, 8))
    m_pad = _round_up(m, tm)

    # v7x megacore: make sure at least 2 "parallel" grid steps exist.
    if (m_pad // tm) * (c2_pad // tn) < 2 and tm % 16 == 0 and tm >= 32:
        tm = tm // 2

    # ---- pad everything to the chosen tile multiples ----
    patches = jnp.pad(patches, ((0, m_pad - m), (0, kd_pad - kd)))
    w_flat = jnp.pad(w_flat, ((0, kd_pad - kd), (0, c2_pad - c2)))
    scale2 = jnp.pad(scale, (0, c2_pad - c2)).reshape(1, c2_pad)
    bias2 = jnp.pad(bias, (0, c2_pad - c2)).reshape(1, c2_pad)

    gi = m_pad // tm
    gj = c2_pad // tn
    compiler_params_kwargs = dict(vmem_limit_bytes=48 * 1024 * 1024)

    if single_k:
        grid = (gi, gj)
        out = pl.pallas_call(
            _make_single_step_kernel(bool(act)),
            out_shape=jax.ShapeDtypeStruct((m_pad, c2_pad), x.dtype),
            grid_spec=pltpu.PrefetchScalarGridSpec(
                num_scalar_prefetch=0,
                grid=grid,
                in_specs=[
                    pl.BlockSpec((tm, tk), lambda i, j: (i, 0)),    # patches
                    pl.BlockSpec((tk, tn), lambda i, j: (0, j)),    # weights
                    pl.BlockSpec((1, tn), lambda i, j: (0, j)),     # scale
                    pl.BlockSpec((1, tn), lambda i, j: (0, j)),     # bias
                ],
                out_specs=pl.BlockSpec((tm, tn), lambda i, j: (i, j)),
            ),
            compiler_params=pltpu.CompilerParams(
                dimension_semantics=("parallel", "parallel"),
                **compiler_params_kwargs,
            ),
        )(patches, w_flat, scale2, bias2)
    else:
        grid = (gi, gj, kd_pad // tk)
        out = pl.pallas_call(
            _make_multi_step_kernel(bool(act)),
            out_shape=jax.ShapeDtypeStruct((m_pad, c2_pad), x.dtype),
            grid_spec=pltpu.PrefetchScalarGridSpec(
                num_scalar_prefetch=0,
                grid=grid,
                in_specs=[
                    pl.BlockSpec((tm, tk), lambda i, j, kk: (i, kk)),   # patches
                    pl.BlockSpec((tk, tn), lambda i, j, kk: (kk, j)),   # weights
                    pl.BlockSpec((1, tn), lambda i, j, kk: (0, j)),     # scale
                    pl.BlockSpec((1, tn), lambda i, j, kk: (0, j)),     # bias
                ],
                out_specs=pl.BlockSpec((tm, tn), lambda i, j, kk: (i, j)),
                scratch_shapes=[pltpu.VMEM((tm, tn), jnp.float32)],
            ),
            compiler_params=pltpu.CompilerParams(
                dimension_semantics=("parallel", "parallel", "arbitrary"),
                **compiler_params_kwargs,
            ),
        )(patches, w_flat, scale2, bias2)

    out = out[:m, :c2].reshape(n, oh, ow, c2)
    return jnp.transpose(out, (0, 3, 1, 2))               # back to NCHW


if __name__ == "__main__":
    key = jax.random.PRNGKey(0)
    ks = jax.random.split(key, 6)

    # Small shapes consistent with the module: batch=2, c1=4 -> c2=8, 16x16, k=3.
    n, c1, c2, k, s = 2, 4, 8, 3, 1
    h = w = 16

    x = jax.random.normal(ks[0], (n, c1, h, w), dtype=jnp.float32)
    weight = jax.random.normal(ks[1], (c2, c1, k, k), dtype=jnp.float32) * 0.1
    gamma = jax.random.uniform(ks[2], (c2,), minval=0.5, maxval=1.5)
    beta = jax.random.normal(ks[3], (c2,)) * 0.1
    running_mean = jax.random.normal(ks[4], (c2,)) * 0.1
    running_var = jax.random.uniform(ks[5], (c2,), minval=0.5, maxval=1.5)

    out = conv_bn_silu(x, weight, gamma, beta, running_mean, running_var,
                       stride=s, padding=None, groups=1, act=True)
    out = jax.block_until_ready(out)

    # Pure-JAX reference (same math as Conv.forward in eval mode).
    p = autopad(k)
    y = jax.lax.conv_general_dilated(
        x, weight, window_strides=(s, s), padding=[(p, p), (p, p)],
        dimension_numbers=("NCHW", "OIHW", "NCHW"), feature_group_count=1)
    ref_scale = gamma / jnp.sqrt(running_var + 1e-5)
    ref_bias = beta - running_mean * ref_scale
    y = y * ref_scale[None, :, None, None] + ref_bias[None, :, None, None]
    ref = y * jax.nn.sigmoid(y)

    assert out.shape == ref.shape == (n, c2, h, w)
    # Tolerance is intentionally 2e-2: bf16 MXU operands + approx-reciprocal
    # sigmoid give ~1e-3..1e-2 deviations vs the pure-f32 reference.
    max_err = float(jnp.max(jnp.abs(out - ref)))
    assert jnp.allclose(out, ref, rtol=2e-2, atol=2e-2), max_err

    print("KERNEL_OK")
</pallas_src>

<mosaic_0001>
module attributes {stable_mosaic.version = 11 : i64} {
  func.func @kernel(%arg0: i32, %arg1: i32, %arg2: memref<256x128xbf16, #tpu.memory_space<vmem>>, %arg3: memref<128x128xbf16, #tpu.memory_space<vmem>>, %arg4: memref<1x128xf32, #tpu.memory_space<vmem>>, %arg5: memref<1x128xf32, #tpu.memory_space<vmem>>, %arg6: memref<256x128xf32, #tpu.memory_space<vmem>>) attributes {dimension_semantics = [#tpu.dimension_semantics<parallel>, #tpu.dimension_semantics<parallel>], iteration_bounds = array<i64: 2, 1>, scalar_prefetch = 0 : i64, scratch_operands = 0 : i64, tpu.core_type = #tpu.core_type<tc>, window_params = [{transform_indices = @transform_0, window_bounds = array<i64: 256, 128>}, {transform_indices = @transform_1, window_bounds = array<i64: 128, 128>}, {transform_indices = @transform_2, window_bounds = array<i64: 1, 128>}, {transform_indices = @transform_3, window_bounds = array<i64: 1, 128>}, {transform_indices = @transform_4, window_bounds = array<i64: 256, 128>}]} {
    %c0 = arith.constant 0 : index
    %c0_0 = arith.constant 0 : index
    %0 = vector.load %arg2[%c0, %c0_0] : memref<256x128xbf16, #tpu.memory_space<vmem>>, vector<256x128xbf16>
    %c0_1 = arith.constant 0 : index
    %c0_2 = arith.constant 0 : index
    %1 = vector.load %arg3[%c0_1, %c0_2] : memref<128x128xbf16, #tpu.memory_space<vmem>>, vector<128x128xbf16>
    %cst = arith.constant dense<0.000000e+00> : vector<256x128xf32>
    %2 = tpu.matmul %0, %1, %cst {dimension_numbers = #tpu.dot_dimension_numbers<[1], [0], [0], [1], [0, 0, 1, 1], [], []>} : vector<256x128xbf16>, vector<128x128xbf16>, vector<256x128xf32> -> vector<256x128xf32>
    %c0_3 = arith.constant 0 : index
    %c0_4 = arith.constant 0 : index
    %3 = vector.load %arg4[%c0_3, %c0_4] : memref<1x128xf32, #tpu.memory_space<vmem>>, vector<1x128xf32>
    %4 = vector.broadcast %3 : vector<1x128xf32> to vector<256x128xf32>
    %5 = arith.mulf %2, %4 : vector<256x128xf32>
    %c0_5 = arith.constant 0 : index
    %c0_6 = arith.constant 0 : index
    %6 = vector.load %arg5[%c0_5, %c0_6] : memref<1x128xf32, #tpu.memory_space<vmem>>, vector<1x128xf32>
    %7 = vector.broadcast %6 : vector<1x128xf32> to vector<256x128xf32>
    %8 = arith.addf %5, %7 : vector<256x128xf32>
    %cst_7 = arith.constant 0.000000e+00 : f32
    %9 = vector.broadcast %cst_7 : f32 to vector<256x128xf32>
    %10 = arith.subf %9, %8 : vector<256x128xf32>
    %11 = math.exp %10 : vector<256x128xf32>
    %cst_8 = arith.constant 1.000000e+00 : f32
    %12 = vector.broadcast %cst_8 : f32 to vector<256x128xf32>
    %13 = arith.addf %12, %11 : vector<256x128xf32>
    %14 = tpu.reciprocal %13 {approx = true} : vector<256x128xf32> -> vector<256x128xf32>
    %15 = arith.mulf %8, %14 : vector<256x128xf32>
    %c0_9 = arith.constant 0 : index
    %c0_10 = arith.constant 0 : index
    %16 = vector.load %arg6[%c0_9, %c0_10] : memref<256x128xf32, #tpu.memory_space<vmem>>, vector<256x128xf32>
    tpu.vector_store %arg6[%c0_9, %c0_10], %15 {strides = array<i32>} : memref<256x128xf32, #tpu.memory_space<vmem>>, vector<256x128xf32>,
    return
  }
  func.func @transform_0(%arg0: i32, %arg1: i32) -> (i32, i32) {
    %c0_i32 = arith.constant 0 : i32
    %c0_i32_0 = arith.constant 0 : i32
    return %arg0, %c0_i32 : i32, i32
  }
  func.func @transform_1(%arg0: i32, %arg1: i32) -> (i32, i32) {
    %c0_i32 = arith.constant 0 : i32
    %c0_i32_0 = arith.constant 0 : i32
    return %c0_i32, %arg1 : i32, i32
  }
  func.func @transform_2(%arg0: i32, %arg1: i32) -> (i32, i32) {
    %c0_i32 = arith.constant 0 : i32
    %c0_i32_0 = arith.constant 0 : i32
    return %c0_i32, %arg1 : i32, i32
  }
  func.func @transform_3(%arg0: i32, %arg1: i32) -> (i32, i32) {
    %c0_i32 = arith.constant 0 : i32
    %c0_i32_0 = arith.constant 0 : i32
    return %c0_i32, %arg1 : i32, i32
  }
  func.func @transform_4(%arg0: i32, %arg1: i32) -> (i32, i32) {
    %c0_i32 = arith.constant 0 : i32
    return %arg0, %arg1 : i32, i32
  }
}

</mosaic_0001>

<llo_original>
// kernel: tpu_custom_call.1
$region0: #{tpu_custom_call.1}
  #allocation0 [shape = 'u32[]', space=smem, size = 0x4, offset = 0x4, fixed_abs, tag = 'smem constant byte address 0x4 - core index']
  #allocation1 [shape = 'u32[144,128]{1,0:T(1,128)}', space=vmem, size = 0x12000, scoped, tag = 'internal scratch']
  %s0 = inlined_call_operand.hbm [shape: bf16[512,128], index: 0, kind: input, shape index: {}]
  %s1 = inlined_call_operand.hbm [shape: bf16[128,128], index: 1, kind: input, shape index: {}]
  %s2 = inlined_call_operand.vmem [shape: f32[1,128], index: 2, kind: input, shape index: {}]
  %s3 = inlined_call_operand.vmem [shape: f32[1,128], index: 3, kind: input, shape index: {}]
  %s4 = inlined_call_operand.hbm [shape: f32[512,128], index: 4, kind: output, shape index: {}]
  %s5 = sld [smem:[#allocation0]]
  $region57: #{tpu_custom_call.1} parent=0
    _
  %s7 = ssub.s32 1, %s5
  %s8 = scalar_select 0, %s7, %s5
  $region1: #{tpu_custom_call.1} parent=0
    #allocation2 [shape = 'u8[131072]{0}', space=vmem, size = 0x20000, scoped, tag = 'input window, operand 0']
    #allocation3 [shape = 's32[2]{0}', space=sflag, size = 0x8, scoped, tag = 'scoped memory for tpu_custom_call.1']
    #allocation4 [shape = 's32[2]{0}', space=sflag, size = 0x8, scoped, tag = 'scoped memory for tpu_custom_call.1']
    #allocation5 [shape = 'u8[32768]{0}', space=vmem, size = 0x8000, scoped, tag = 'input window, operand 1, single buffered']
    #allocation6 [shape = 's32[1]{0}', space=sflag, size = 0x4, scoped, tag = 'scoped memory for tpu_custom_call.1']
    #allocation7 [shape = 'u8[262144]{0}', space=vmem, size = 0x40000, scoped, tag = 'output window, operand 0']
    %9 = vsyncpa [#allocation3], 0
    %s10 = scalar_lea.sflag [#allocation3], 1
    %11 = vsyncpa %s10, 0
    %12 = vsyncpa [#allocation6], 0
    %13 = vsyncpa [#allocation4], 0
    %s14 = scalar_lea.sflag [#allocation4], 1
    %15 = vsyncpa %s14, 0
    loop: start=0, step=1, limit=4
    $region2: #{tpu_custom_call.1} parent=1 // loop_pre_header
      _
    $region3: #{tpu_custom_call.1} parent=1 // loop_header
      %s17 = sphi 0, %s21
      %p18 = scmp.ge.s32.totalorder %s17, 4
      %s24 = sphi 0, %s36
      %s25 = sphi 0, %s32
      %s26 = sphi 0, %s24
      %s27 = sphi 0, %s25
      %s28 = sphi 0, %s26
      %s29 = sphi 0, %s27
      %s39 = sphi 0, %s41
      %s42 = sphi 0, %s39
      %s43 = sphi 0, %s42
      %s59 = sphi 0, %s43
      %s65 = sphi 0, %s67
      %s68 = sphi 0, %s65
      %s69 = sphi 0, %s68
      %s85 = sphi 0, %s69
      %s91 = sphi 0, %s93
      %s94 = sphi 0, %s91
      %s95 = sphi 0, %s94
      %s111 = sphi 0, %s95
      %s117 = sphi 0, %s119
      %s120 = sphi 0, %s117
      %s121 = sphi 0, %s120
      %s137 = sphi 0, %s121
      %s145 = sphi 0, %s147
      %s148 = sphi 0, %s145
      %s149 = sphi 0, %s148
      %s165 = sphi 0, %s149
    $region4: #{tpu_custom_call.1} parent=1 // loop_header_branch
      %20 = sbr.rel (%p18) target = $region8
    $region5: #{tpu_custom_call.1} parent=1 // loop_body
      %s22 = ssub.s32 %s17, 1
      %s23 = ssub.s32 %s17, 2
      %s30 = sadd.s32 1, %s25
      %p31 = scmp.ge.s32.totalorder %s30, 1
      %s32 = scalar_select %p31, 0, %s30
      %s33 = sadd.s32 1, %s24
      %s34 = scalar_select %p31, %s33, %s24
      %p35 = scmp.ge.s32.totalorder %s34, 2
      %s36 = scalar_select %p35, 0, %s34
      %s37 = ssub.s32 %s24, %s36
      %p38 = scmp.eq.s32.totalorder %s37, 0
      %s40 = sadd.s32 %s39, 1
      %s41 = scalar_select %p38, %s39, %s40
      %p44 = pneg %p38
      %p45 = scmp.eq.s32.totalorder %s17, 1
      %p46 = por %p44, %p45
      %p47 = scmp.ne.s32.totalorder %s39, %s42
      %p48 = scmp.eq.s32.totalorder %s17, 0
      %p49 = por %p47, %p48
      %p50 = scmp.ne.s32.totalorder %s39, %s42
      %p51 = scmp.eq.s32.totalorder %s22, 1
      %p52 = por %p50, %p51
      %p53 = scmp.ne.s32.totalorder %s42, %s43
      %p54 = scmp.eq.s32.totalorder %s22, 0
      %p55 = por %p53, %p54
      %p56 = scmp.ne.s32.totalorder %s42, %s43
      %p57 = scmp.eq.s32.totalorder %s23, 1
      %p58 = por %p56, %p57
      %p60 = scmp.ne.s32.totalorder %s43, %s59
      %p61 = scmp.eq.s32.totalorder %s23, 0
      %p62 = por %p60, %p61
      %s63 = ssub.s32 %s25, %s32
      %p64 = scmp.eq.s32.totalorder %s63, 0
      %s66 = sadd.s32 %s65, 1
      %s67 = scalar_select %p64, %s65, %s66
      %p70 = pneg %p64
      %p71 = scmp.eq.s32.totalorder %s17, 1
      %p72 = por %p70, %p71
      %p73 = scmp.ne.s32.totalorder %s65, %s68
      %p74 = scmp.eq.s32.totalorder %s17, 0
      %p75 = por %p73, %p74
      %p76 = scmp.ne.s32.totalorder %s65, %s68
      %p77 = scmp.eq.s32.totalorder %s22, 1
      %p78 = por %p76, %p77
      %p79 = scmp.ne.s32.totalorder %s68, %s69
      %p80 = scmp.eq.s32.totalorder %s22, 0
      %p81 = por %p79, %p80
      %p82 = scmp.ne.s32.totalorder %s68, %s69
      %p83 = scmp.eq.s32.totalorder %s23, 1
      %p84 = por %p82, %p83
      %p86 = scmp.ne.s32.totalorder %s69, %s85
      %p87 = scmp.eq.s32.totalorder %s23, 0
      %p88 = por %p86, %p87
      %s89 = ssub.s32 %s25, %s32
      %p90 = scmp.eq.s32.totalorder %s89, 0
      %s92 = sadd.s32 %s91, 1
      %s93 = scalar_select %p90, %s91, %s92
      %p96 = pneg %p90
      %p97 = scmp.eq.s32.totalorder %s17, 1
      %p98 = por %p96, %p97
      %p99 = scmp.ne.s32.totalorder %s91, %s94
      %p100 = scmp.eq.s32.totalorder %s17, 0
      %p101 = por %p99, %p100
      %p102 = scmp.ne.s32.totalorder %s91, %s94
      %p103 = scmp.eq.s32.totalorder %s22, 1
      %p104 = por %p102, %p103
      %p105 = scmp.ne.s32.totalorder %s94, %s95
      %p106 = scmp.eq.s32.totalorder %s22, 0
      %p107 = por %p105, %p106
      %p108 = scmp.ne.s32.totalorder %s94, %s95
      %p109 = scmp.eq.s32.totalorder %s23, 1
      %p110 = por %p108, %p109
      %p112 = scmp.ne.s32.totalorder %s95, %s111
      %p113 = scmp.eq.s32.totalorder %s23, 0
      %p114 = por %p112, %p113
      %s115 = ssub.s32 %s25, %s32
      %p116 = scmp.eq.s32.totalorder %s115, 0
      %s118 = sadd.s32 %s117, 1
      %s119 = scalar_select %p116, %s117, %s118
      %p122 = pneg %p116
      %p123 = scmp.eq.s32.totalorder %s17, 1
      %p124 = por %p122, %p123
      %p125 = scmp.ne.s32.totalorder %s117, %s120
      %p126 = scmp.eq.s32.totalorder %s17, 0
      %p127 = por %p125, %p126
      %p128 = scmp.ne.s32.totalorder %s117, %s120
      %p129 = scmp.eq.s32.totalorder %s22, 1
      %p130 = por %p128, %p129
      %p131 = scmp.ne.s32.totalorder %s120, %s121
      %p132 = scmp.eq.s32.totalorder %s22, 0
      %p133 = por %p131, %p132
      %p134 = scmp.ne.s32.totalorder %s120, %s121
      %p135 = scmp.eq.s32.totalorder %s23, 1
      %p136 = por %p134, %p135
      %p138 = scmp.ne.s32.totalorder %s121, %s137
      %p139 = scmp.eq.s32.totalorder %s23, 0
      %p140 = por %p138, %p139
      %s141 = ssub.s32 %s24, %s36
      %s142 = ssub.s32 %s25, %s32
      %s143 = sor.u32 %s141, %s142
      %p144 = scmp.eq.s32.totalorder %s143, 0
      %s146 = sadd.s32 %s145, 1
      %s147 = scalar_select %p144, %s145, %s146
      %p150 = pneg %p144
      %p151 = scmp.eq.s32.totalorder %s17, 1
      %p152 = por %p150, %p151
      %p153 = scmp.ne.s32.totalorder %s145, %s148
      %p154 = scmp.eq.s32.totalorder %s17, 0
      %p155 = por %p153, %p154
      %p156 = scmp.ne.s32.totalorder %s145, %s148
      %p157 = scmp.eq.s32.totalorder %s22, 1
      %p158 = por %p156, %p157
      %p159 = scmp.ne.s32.totalorder %s148, %s149
      %p160 = scmp.eq.s32.totalorder %s22, 0
      %p161 = por %p159, %p160
      %p162 = scmp.ne.s32.totalorder %s148, %s149
      %p163 = scmp.eq.s32.totalorder %s23, 1
      %p164 = por %p162, %p163
      %p166 = scmp.ne.s32.totalorder %s149, %s165
      %p167 = scmp.eq.s32.totalorder %s23, 0
      %p168 = por %p166, %p167
      %p169 = scmp.le.s32.totalorder 1, %s17
      %p170 = scmp.lt.s32.totalorder %s17, 3
      %p171 = pnand %p169, %p170
      %p172 = pneg %p171
      // Predicated region
      $region9: #{tpu_custom_call.1} parent=5 // pred_check
        _
      $region10: #{tpu_custom_call.1} parent=5 // pred_check_branch
        %174 = sbr.rel (%p171) target = $region12
      $region11: #{tpu_custom_call.1} parent=5 // pred_region
        %s175 = ssub.s32 %s17, 1
        // Predicated region
        $region13: #{tpu_custom_call.1} parent=11 // pred_check
          %p176 = pneg %p81
        $region14: #{tpu_custom_call.1} parent=11 // pred_check_branch
          %178 = sbr.rel (%p176) target = $region16
        $region15: #{tpu_custom_call.1} parent=11 // pred_region
          %s180 = ssub.s32 1024, 1024
          %181 = vsyncadd [#allocation6], %s180
          %s182 = smul.addr %s27, 64
          %s183 = scalar_lea.hbm %s1, %s182
          %s184 = sshll.u32 [#allocation5], 4
          %s185 = int_to_ptr.vmem [resolvable:$true] %s184
          %190 = dma.hbm_to_vmem [thread:$0]  %s183, 1024, %s185, [#allocation6], 64, 64, 4
        $region16: #{tpu_custom_call.1} parent=11 // pred_fallthru
          _
        // Predicated region
        $region17: #{tpu_custom_call.1} parent=11 // pred_check
          %p191 = pneg %p107
        $region18: #{tpu_custom_call.1} parent=11 // pred_check_branch
          %193 = sbr.rel (%p191) target = $region20
        $region19: #{tpu_custom_call.1} parent=11 // pred_region
          %p194 = scmp.lt.s32.totalorder %s27, 0
          %s195 = scalar_select %p194, %s27, 0
          %s196 = scalar_lea.vmem %s2, %s195
        $region20: #{tpu_custom_call.1} parent=11 // pred_fallthru
          _
        // Predicated region
        $region21: #{tpu_custom_call.1} parent=11 // pred_check
          %p197 = pneg %p133
        $region22: #{tpu_custom_call.1} parent=11 // pred_check_branch
          %199 = sbr.rel (%p197) target = $region24
        $region23: #{tpu_custom_call.1} parent=11 // pred_region
          %p200 = scmp.lt.s32.totalorder %s27, 0
          %s201 = scalar_select %p200, %s27, 0
          %s202 = scalar_lea.vmem %s3, %s201
        $region24: #{tpu_custom_call.1} parent=11 // pred_fallthru
          _
      $region12: #{tpu_custom_call.1} parent=5 // pred_fallthru
        _
      %p203 = scmp.lt.s32.totalorder %s17, 2
      // Predicated region
      $region25: #{tpu_custom_call.1} parent=5 // pred_check
        %p204 = pneg %p203
      $region26: #{tpu_custom_call.1} parent=5 // pred_check_branch
        %206 = sbr.rel (%p204) target = $region28
      $region27: #{tpu_custom_call.1} parent=5 // pred_region
        // Predicated region
        $region29: #{tpu_custom_call.1} parent=27 // pred_check
          %p207 = pneg %p49
        $region30: #{tpu_custom_call.1} parent=27 // pred_check_branch
          %209 = sbr.rel (%p207) target = $region32
        $region31: #{tpu_custom_call.1} parent=27 // pred_region
          %s210 = sand.u32 %s39, 1
          %s211 = scalar_lea.sflag [#allocation3], %s210
          %s212 = sand.u32 %s39, 1
          %s213 = smul.addr %s212, 128
          %s214 = scalar_lea.vmem [#allocation2], %s213
          %s215 = smul.u32 32, %s24
          %s217 = ssub.s32 2048, 2048
          %218 = vsyncadd %s211, %s217
          %s219 = smul.addr %s215, 64
          %s220 = scalar_lea.hbm %s0, %s219
          %s221 = sshll.u32 %s214, 4
          %s222 = int_to_ptr.vmem [resolvable:$true] %s221
          %227 = dma.hbm_to_vmem [thread:$0]  %s220, 2048, %s222, %s211, 64, 64, 4
        $region32: #{tpu_custom_call.1} parent=27 // pred_fallthru
          _
      $region28: #{tpu_custom_call.1} parent=5 // pred_fallthru
        _
      %p228 = scmp.le.s32.totalorder 1, %s17
      %p229 = scmp.lt.s32.totalorder %s17, 3
      %p230 = pnand %p228, %p229
      %p231 = pneg %p230
      // Predicated region
      $region33: #{tpu_custom_call.1} parent=5 // pred_check
        _
      $region34: #{tpu_custom_call.1} parent=5 // pred_check_branch
        %233 = sbr.rel (%p230) target = $region36
      $region35: #{tpu_custom_call.1} parent=5 // pred_region
        %s234 = ssub.s32 %s17, 1
        %s235 = sand.u32 %s42, 1
        %s236 = scalar_lea.sflag [#allocation3], %s235
        %s237 = sand.u32 %s42, 1
        %s238 = smul.addr %s237, 128
        %s239 = scalar_lea.vmem [#allocation2], %s238
        // Predicated region
        $region37: #{tpu_custom_call.1} parent=35 // pred_check
          %p240 = pneg %p55
        $region38: #{tpu_custom_call.1} parent=35 // pred_check_branch
          %242 = sbr.rel (%p240) target = $region40
        $region39: #{tpu_custom_call.1} parent=35 // pred_region
          %243 = dma.done %s236, 2048
        $region40: #{tpu_custom_call.1} parent=35 // pred_fallthru
          _
        // Predicated region
        $region41: #{tpu_custom_call.1} parent=35 // pred_check
          %p244 = pneg %p81
        $region42: #{tpu_custom_call.1} parent=35 // pred_check_branch
          %246 = sbr.rel (%p244) target = $region44
        $region43: #{tpu_custom_call.1} parent=35 // pred_region
          %247 = dma.done [#allocation6], 1024
        $region44: #{tpu_custom_call.1} parent=35 // pred_fallthru
          _
        %s248 = sand.u32 %s42, 1
        %s249 = scalar_lea.sflag [#allocation3], %s248
        %s250 = sand.u32 %s42, 1
        %s251 = smul.addr %s250, 128
        %s252 = scalar_lea.vmem [#allocation2], %s251
        %p253 = pneg %p55
        %p254 = pneg %p52
        %p255 = pneg %p81
        %p256 = pneg %p78
        %p257 = scmp.lt.s32.totalorder %s27, 0
        %s258 = scalar_select %p257, %s27, 0
        %s259 = scalar_lea.vmem %s2, %s258
        %p260 = pneg %p107
        %p261 = pneg %p104
        %p262 = scmp.lt.s32.totalorder %s27, 0
        %s263 = scalar_select %p262, %s27, 0
        %s264 = scalar_lea.vmem %s3, %s263
        %p265 = pneg %p133
        %p266 = pneg %p130
        %p267 = pneg %p161
        %p268 = pneg %p158
        %s269 = sand.u32 %s148, 1
        %s270 = scalar_lea.sflag [#allocation4], %s269
        %s271 = sand.u32 %s148, 1
        %s272 = smul.addr %s271, 256
        %s273 = scalar_lea.vmem [#allocation7], %s272
        %s274 = smul.u32 32, %s26
        %p275 = scmp.lt.s32.totalorder %s27, 0
        %s276 = scalar_select %p275, %s27, 0
        %s277 = scalar_lea.vmem %s2, %s276
        %p278 = scmp.lt.s32.totalorder %s27, 0
        %s279 = scalar_select %p278, %s27, 0
        %s280 = scalar_lea.vmem %s3, %s279
        %s281 = smul.u32 32, %s26
        %v283 = vld [vmem:[%s239] sm:$0xf]
        %v284 = vld [vmem:[%s239 + $0x4] sm:$0xf]
        %v285 = vld [vmem:[%s239 + $0x8] sm:$0xf]
        %v286 = vld [vmem:[%s239 + $0xc] sm:$0xf]
        %v287 = vld [vmem:[%s239 + $0x10] sm:$0xf]
        %v288 = vld [vmem:[%s239 + $0x14] sm:$0xf]
        %v289 = vld [vmem:[%s239 + $0x18] sm:$0xf]
        %v290 = vld [vmem:[%s239 + $0x1c] sm:$0xf]
        %v291 = vld [vmem:[%s239 + $0x20] sm:$0xf]
        %v292 = vld [vmem:[%s239 + $0x24] sm:$0xf]
        %v293 = vld [vmem:[%s239 + $0x28] sm:$0xf]
        %v294 = vld [vmem:[%s239 + $0x2c] sm:$0xf]
        %v295 = vld [vmem:[%s239 + $0x30] sm:$0xf]
        %v296 = vld [vmem:[%s239 + $0x34] sm:$0xf]
        %v297 = vld [vmem:[%s239 + $0x38] sm:$0xf]
        %v298 = vld [vmem:[%s239 + $0x3c] sm:$0xf]
        %v299 = vld [vmem:[%s239 + $0x40] sm:$0xf]
        %v300 = vld [vmem:[%s239 + $0x44] sm:$0xf]
        %v301 = vld [vmem:[%s239 + $0x48] sm:$0xf]
        %v302 = vld [vmem:[%s239 + $0x4c] sm:$0xf]
        %v303 = vld [vmem:[%s239 + $0x50] sm:$0xf]
        %v304 = vld [vmem:[%s239 + $0x54] sm:$0xf]
        %v305 = vld [vmem:[%s239 + $0x58] sm:$0xf]
        %v306 = vld [vmem:[%s239 + $0x5c] sm:$0xf]
        %v307 = vld [vmem:[%s239 + $0x60] sm:$0xf]
        %v308 = vld [vmem:[%s239 + $0x64] sm:$0xf]
        %v309 = vld [vmem:[%s239 + $0x68] sm:$0xf]
        %v310 = vld [vmem:[%s239 + $0x6c] sm:$0xf]
        %v311 = vld [vmem:[%s239 + $0x70] sm:$0xf]
        %v312 = vld [vmem:[%s239 + $0x74] sm:$0xf]
        %v313 = vld [vmem:[%s239 + $0x78] sm:$0xf]
        %v314 = vld [vmem:[%s239 + $0x7c] sm:$0xf]
        %v315 = vld [vmem:[#allocation5] sm:$0xf]
        %v316 = vld [vmem:[#allocation5 + $0x4] sm:$0xf]
        %v317 = vld [vmem:[#allocation5 + $0x8] sm:$0xf]
        %v318 = vld [vmem:[#allocation5 + $0xc] sm:$0xf]
        %v319 = vld [vmem:[#allocation5 + $0x10] sm:$0xf]
        %v320 = vld [vmem:[#allocation5 + $0x14] sm:$0xf]
        %v321 = vld [vmem:[#allocation5 + $0x18] sm:$0xf]
        %v322 = vld [vmem:[#allocation5 + $0x1c] sm:$0xf]
        %v323 = vld [vmem:[#allocation5 + $0x20] sm:$0xf]
        %v324 = vld [vmem:[#allocation5 + $0x24] sm:$0xf]
        %v325 = vld [vmem:[#allocation5 + $0x28] sm:$0xf]
        %v326 = vld [vmem:[#allocation5 + $0x2c] sm:$0xf]
        %v327 = vld [vmem:[#allocation5 + $0x30] sm:$0xf]
        %v328 = vld [vmem:[#allocation5 + $0x34] sm:$0xf]
        %v329 = vld [vmem:[#allocation5 + $0x38] sm:$0xf]
        %v330 = vld [vmem:[#allocation5 + $0x3c] sm:$0xf]
        %v363 = vunpack.c.l.b16 %v283
        %v364 = vunpack.c.l.b16 %v284
        %v365 = vunpack.c.l.b16 %v285
        %v366 = vunpack.c.l.b16 %v286
        %v367 = vunpack.c.l.b16 %v287
        %v368 = vunpack.c.l.b16 %v288
        %v369 = vunpack.c.l.b16 %v289
        %v370 = vunpack.c.l.b16 %v290
        %v371 = vunpack.c.l.b16 %v291
        %v372 = vunpack.c.l.b16 %v292
        %v373 = vunpack.c.l.b16 %v293
        %v374 = vunpack.c.l.b16 %v294
        %v375 = vunpack.c.l.b16 %v295
        %v376 = vunpack.c.l.b16 %v296
        %v377 = vunpack.c.l.b16 %v297
        %v378 = vunpack.c.l.b16 %v298
        %v379 = vunpack.c.l.b16 %v299
        %v380 = vunpack.c.l.b16 %v300
        %v381 = vunpack.c.l.b16 %v301
        %v382 = vunpack.c.l.b16 %v302
        %v383 = vunpack.c.l.b16 %v303
        %v384 = vunpack.c.l.b16 %v304
        %v385 = vunpack.c.l.b16 %v305
        %v386 = vunpack.c.l.b16 %v306
        %v387 = vunpack.c.l.b16 %v307
        %v388 = vunpack.c.l.b16 %v308
        %v389 = vunpack.c.l.b16 %v309
        %v390 = vunpack.c.l.b16 %v310
        %v391 = vunpack.c.l.b16 %v311
        %v392 = vunpack.c.l.b16 %v312
        %v393 = vunpack.c.l.b16 %v313
        %v394 = vunpack.c.l.b16 %v314
        %v395 = vpack.c.b16 %v364, %v363
        %v396 = vpack.c.b16 %v366, %v365
        %v397 = vpack.c.b16 %v368, %v367
        %v398 = vpack.c.b16 %v370, %v369
        %v399 = vpack.c.b16 %v372, %v371
        %v400 = vpack.c.b16 %v374, %v373
        %v401 = vpack.c.b16 %v376, %v375
        %v402 = vpack.c.b16 %v378, %v377
        %v403 = vpack.c.b16 %v380, %v379
        %v404 = vpack.c.b16 %v382, %v381
        %v405 = vpack.c.b16 %v384, %v383
        %v406 = vpack.c.b16 %v386, %v385
        %v407 = vpack.c.b16 %v388, %v387
        %v408 = vpack.c.b16 %v390, %v389
        %v409 = vpack.c.b16 %v392, %v391
        %v410 = vpack.c.b16 %v394, %v393
        %v443 = vunpack.c.l.b16 %v315
        %v444 = vunpack.c.l.b16 %v316
        %v445 = vunpack.c.l.b16 %v317
        %v446 = vunpack.c.l.b16 %v318
        %v447 = vunpack.c.l.b16 %v319
        %v448 = vunpack.c.l.b16 %v320
        %v449 = vunpack.c.l.b16 %v321
        %v450 = vunpack.c.l.b16 %v322
        %v451 = vunpack.c.l.b16 %v323
        %v452 = vunpack.c.l.b16 %v324
        %v453 = vunpack.c.l.b16 %v325
        %v454 = vunpack.c.l.b16 %v326
        %v455 = vunpack.c.l.b16 %v327
        %v456 = vunpack.c.l.b16 %v328
        %v457 = vunpack.c.l.b16 %v329
        %v458 = vunpack.c.l.b16 %v330
        %v459 = vpack.c.b16 %v444, %v443
        %v460 = vpack.c.b16 %v446, %v445
        %v461 = vpack.c.b16 %v448, %v447
        %v462 = vpack.c.b16 %v450, %v449
        %v463 = vpack.c.b16 %v452, %v451
        %v464 = vpack.c.b16 %v454, %v453
        %v465 = vpack.c.b16 %v456, %v455
        %v466 = vpack.c.b16 %v458, %v457
        %475 = vmatprep.subr.bf16.mxu0 0
        %476 = vmatpush1.bf16.msra.mxu0 %v466
        %477 = vmatprep.subr.bf16.mxu0 0
        %478 = vmatpush1.bf16.msra.mxu0 %v465
        %479 = vmatprep.subr.bf16.mxu0 0
        %480 = vmatpush1.bf16.msra.mxu0 %v464
        %481 = vmatprep.subr.bf16.mxu0 0
        %482 = vmatpush1.bf16.msra.mxu0 %v463
        %483 = vmatprep.subr.bf16.mxu0 0
        %484 = vmatpush1.bf16.msra.mxu0 %v462
        %485 = vmatprep.subr.bf16.mxu0 0
        %486 = vmatpush1.bf16.msra.mxu0 %v461
        %487 = vmatprep.subr.bf16.mxu0 0
        %488 = vmatpush1.bf16.msra.mxu0 %v460
        %489 = vmatprep.subr.bf16.mxu0 0
        %490 = vmatpush1.bf16.msra.mxu0 %v459
        %491 = vmatprep.subr.bf16.mxu0 0
        %492 = vmatpush2.bf16.msra.mxu0 0
        %493 = vmatprep.subr.bf16.mxu0 0
        %494 = vmatpush2.bf16.msra.mxu0 0
        %495 = vmatprep.subr.bf16.mxu0 0
        %496 = vmatpush2.bf16.msra.mxu0 0
        %497 = vmatprep.subr.bf16.mxu0 0
        %498 = vmatpush2.bf16.msra.mxu0 0
        %499 = vmatprep.subr.bf16.mxu0 0
        %500 = vmatpush2.bf16.msra.mxu0 0
        %501 = vmatprep.subr.bf16.mxu0 0
        %502 = vmatpush2.bf16.msra.mxu0 0
        %503 = vmatprep.subr.bf16.mxu0 0
        %504 = vmatpush2.bf16.msra.mxu0 0
        %505 = vmatprep.subr.bf16.mxu0 0
        %506 = vmatpush2.bf16.msra.mxu0 0
        %507 = vmatprep.mubr.bf16.mxu0 0
        %508 = vmatmul.mubr.bf16.gmra.mxu0 %v395
        %v509 = vpop.f32.mrf.mxu0
        %v510 = vadd.f32 0.0, %v509
        %v511 = vpop.f32.mrf.mxu0
        %v512 = vpop.f32.mrf.mxu0
        %v513 = vadd.f32 0.0, %v512
        %v514 = vpop.f32.mrf.mxu0
        %515 = vmatprep.mubr.bf16.mxu0 0
        %516 = vmatmul.mubr.bf16.gmra.mxu0 %v396
        %v517 = vpop.f32.mrf.mxu0
        %v518 = vadd.f32 0.0, %v517
        %v519 = vpop.f32.mrf.mxu0
        %v520 = vpop.f32.mrf.mxu0
        %v521 = vadd.f32 0.0, %v520
        %v522 = vpop.f32.mrf.mxu0
        %523 = vmatprep.mubr.bf16.mxu0 0
        %524 = vmatmul.mubr.bf16.gmra.mxu0 %v397
        %v525 = vpop.f32.mrf.mxu0
        %v526 = vadd.f32 0.0, %v525
        %v527 = vpop.f32.mrf.mxu0
        %v528 = vpop.f32.mrf.mxu0
        %v529 = vadd.f32 0.0, %v528
        %v530 = vpop.f32.mrf.mxu0
        %531 = vmatprep.mubr.bf16.mxu0 0
        %532 = vmatmul.mubr.bf16.gmra.mxu0 %v398
        %v533 = vpop.f32.mrf.mxu0
        %v534 = vadd.f32 0.0, %v533
        %v535 = vpop.f32.mrf.mxu0
        %v536 = vpop.f32.mrf.mxu0
        %v537 = vadd.f32 0.0, %v536
        %v538 = vpop.f32.mrf.mxu0
        %539 = vmatprep.mubr.bf16.mxu0 0
        %540 = vmatmul.mubr.bf16.gmra.mxu0 %v399
        %v541 = vpop.f32.mrf.mxu0
        %v542 = vadd.f32 0.0, %v541
        %v543 = vpop.f32.mrf.mxu0
        %v544 = vpop.f32.mrf.mxu0
        %v545 = vadd.f32 0.0, %v544
        %v546 = vpop.f32.mrf.mxu0
        %547 = vmatprep.mubr.bf16.mxu0 0
        %548 = vmatmul.mubr.bf16.gmra.mxu0 %v400
        %v549 = vpop.f32.mrf.mxu0
        %v550 = vadd.f32 0.0, %v549
        %v551 = vpop.f32.mrf.mxu0
        %v552 = vpop.f32.mrf.mxu0
        %v553 = vadd.f32 0.0, %v552
        %v554 = vpop.f32.mrf.mxu0
        %555 = vmatprep.mubr.bf16.mxu0 0
        %556 = vmatmul.mubr.bf16.gmra.mxu0 %v401
        %v557 = vpop.f32.mrf.mxu0
        %v558 = vadd.f32 0.0, %v557
        %v559 = vpop.f32.mrf.mxu0
        %v560 = vpop.f32.mrf.mxu0
        %v561 = vadd.f32 0.0, %v560
        %v562 = vpop.f32.mrf.mxu0
        %563 = vmatprep.mubr.bf16.mxu0 0
        %564 = vmatmul.mubr.bf16.gmra.mxu0 %v402
        %v565 = vpop.f32.mrf.mxu0
        %v566 = vadd.f32 0.0, %v565
        %v567 = vpop.f32.mrf.mxu0
        %v568 = vpop.f32.mrf.mxu0
        %v569 = vadd.f32 0.0, %v568
        %v570 = vpop.f32.mrf.mxu0
        %571 = vmatprep.mubr.bf16.mxu0 0
        %572 = vmatmul.mubr.bf16.gmra.mxu0 %v403
        %v573 = vpop.f32.mrf.mxu0
        %v574 = vadd.f32 0.0, %v573
        %v575 = vpop.f32.mrf.mxu0
        %v576 = vpop.f32.mrf.mxu0
        %v577 = vadd.f32 0.0, %v576
        %v578 = vpop.f32.mrf.mxu0
        %579 = vmatprep.mubr.bf16.mxu0 0
        %580 = vmatmul.mubr.bf16.gmra.mxu0 %v404
        %v581 = vpop.f32.mrf.mxu0
        %v582 = vadd.f32 0.0, %v581
        %v583 = vpop.f32.mrf.mxu0
        %v584 = vpop.f32.mrf.mxu0
        %v585 = vadd.f32 0.0, %v584
        %v586 = vpop.f32.mrf.mxu0
        %587 = vmatprep.mubr.bf16.mxu0 0
        %588 = vmatmul.mubr.bf16.gmra.mxu0 %v405
        %v589 = vpop.f32.mrf.mxu0
        %v590 = vadd.f32 0.0, %v589
        %v591 = vpop.f32.mrf.mxu0
        %v592 = vpop.f32.mrf.mxu0
        %v593 = vadd.f32 0.0, %v592
        %v594 = vpop.f32.mrf.mxu0
        %595 = vmatprep.mubr.bf16.mxu0 0
        %596 = vmatmul.mubr.bf16.gmra.mxu0 %v406
        %v597 = vpop.f32.mrf.mxu0
        %v598 = vadd.f32 0.0, %v597
        %v599 = vpop.f32.mrf.mxu0
        %v600 = vpop.f32.mrf.mxu0
        %v601 = vadd.f32 0.0, %v600
        %v602 = vpop.f32.mrf.mxu0
        %603 = vmatprep.mubr.bf16.mxu0 0
        %604 = vmatmul.mubr.bf16.gmra.mxu0 %v407
        %v605 = vpop.f32.mrf.mxu0
        %v606 = vadd.f32 0.0, %v605
        %v607 = vpop.f32.mrf.mxu0
        %v608 = vpop.f32.mrf.mxu0
        %v609 = vadd.f32 0.0, %v608
        %v610 = vpop.f32.mrf.mxu0
        %611 = vmatprep.mubr.bf16.mxu0 0
        %612 = vmatmul.mubr.bf16.gmra.mxu0 %v408
        %v613 = vpop.f32.mrf.mxu0
        %v614 = vadd.f32 0.0, %v613
        %v615 = vpop.f32.mrf.mxu0
        %v616 = vpop.f32.mrf.mxu0
        %v617 = vadd.f32 0.0, %v616
        %v618 = vpop.f32.mrf.mxu0
        %619 = vmatprep.mubr.bf16.mxu0 0
        %620 = vmatmul.mubr.bf16.gmra.mxu0 %v409
        %v621 = vpop.f32.mrf.mxu0
        %v622 = vadd.f32 0.0, %v621
        %v623 = vpop.f32.mrf.mxu0
        %v624 = vpop.f32.mrf.mxu0
        %v625 = vadd.f32 0.0, %v624
        %v626 = vpop.f32.mrf.mxu0
        %627 = vmatprep.mubr.bf16.mxu0 0
        %628 = vmatmul.mubr.bf16.gmra.mxu0 %v410
        %v629 = vpop.f32.mrf.mxu0
        %v630 = vadd.f32 0.0, %v629
        %v631 = vpop.f32.mrf.mxu0
        %v632 = vpop.f32.mrf.mxu0
        %v633 = vadd.f32 0.0, %v632
        %v634 = vpop.f32.mrf.mxu0
        %635 = vdwg.mxu0
        %v636 = vld [vmem:[%s277] sm:$0x1]
        %v638 = vlaneseq
        %v639 = vshrl.u32 %v638, 7
        %v640 = vsub.s32 0, %v639
        %v641 = vrot.slane %v636, %v640
        %v643 = vmul.f32 %v510, %v641
        %v644 = vmul.f32 %v513, %v641
        %v645 = vmul.f32 %v518, %v641
        %v646 = vmul.f32 %v521, %v641
        %v647 = vmul.f32 %v526, %v641
        %v648 = vmul.f32 %v529, %v641
        %v649 = vmul.f32 %v534, %v641
        %v650 = vmul.f32 %v537, %v641
        %v651 = vmul.f32 %v542, %v641
        %v652 = vmul.f32 %v545, %v641
        %v653 = vmul.f32 %v550, %v641
        %v654 = vmul.f32 %v553, %v641
        %v655 = vmul.f32 %v558, %v641
        %v656 = vmul.f32 %v561, %v641
        %v657 = vmul.f32 %v566, %v641
        %v658 = vmul.f32 %v569, %v641
        %v659 = vmul.f32 %v574, %v641
        %v660 = vmul.f32 %v577, %v641
        %v661 = vmul.f32 %v582, %v641
        %v662 = vmul.f32 %v585, %v641
        %v663 = vmul.f32 %v590, %v641
        %v664 = vmul.f32 %v593, %v641
        %v665 = vmul.f32 %v598, %v641
        %v666 = vmul.f32 %v601, %v641
        %v667 = vmul.f32 %v606, %v641
        %v668 = vmul.f32 %v609, %v641
        %v669 = vmul.f32 %v614, %v641
        %v670 = vmul.f32 %v617, %v641
        %v671 = vmul.f32 %v622, %v641
        %v672 = vmul.f32 %v625, %v641
        %v673 = vmul.f32 %v630, %v641
        %v674 = vmul.f32 %v633, %v641
        %v675 = vld [vmem:[%s280] sm:$0x1]
        %v677 = vlaneseq
        %v678 = vshrl.u32 %v677, 7
        %v679 = vsub.s32 0, %v678
        %v680 = vrot.slane %v675, %v679
        %v682 = vadd.f32 %v643, %v680
        %v683 = vadd.f32 %v644, %v680
        %v684 = vadd.f32 %v645, %v680
        %v685 = vadd.f32 %v646, %v680
        %v686 = vadd.f32 %v647, %v680
        %v687 = vadd.f32 %v648, %v680
        %v688 = vadd.f32 %v649, %v680
        %v689 = vadd.f32 %v650, %v680
        %v690 = vadd.f32 %v651, %v680
        %v691 = vadd.f32 %v652, %v680
        %v692 = vadd.f32 %v653, %v680
        %v693 = vadd.f32 %v654, %v680
        %v694 = vadd.f32 %v655, %v680
        %v695 = vadd.f32 %v656, %v680
        %v696 = vadd.f32 %v657, %v680
        %v697 = vadd.f32 %v658, %v680
        %v698 = vadd.f32 %v659, %v680
        %v699 = vadd.f32 %v660, %v680
        %v700 = vadd.f32 %v661, %v680
        %v701 = vadd.f32 %v662, %v680
        %v702 = vadd.f32 %v663, %v680
        %v703 = vadd.f32 %v664, %v680
        %v704 = vadd.f32 %v665, %v680
        %v705 = vadd.f32 %v666, %v680
        %v706 = vadd.f32 %v667, %v680
        %v707 = vadd.f32 %v668, %v680
        %v708 = vadd.f32 %v669, %v680
        %v709 = vadd.f32 %v670, %v680
        %v710 = vadd.f32 %v671, %v680
        %v711 = vadd.f32 %v672, %v680
        %v712 = vadd.f32 %v673, %v680
        %v713 = vadd.f32 %v674, %v680
        %v714 = vsub.f32 0.0, %v682
        %v715 = vsub.f32 0.0, %v683
        %v716 = vsub.f32 0.0, %v684
        %v717 = vsub.f32 0.0, %v685
        %v718 = vsub.f32 0.0, %v686
        %v719 = vsub.f32 0.0, %v687
        %v720 = vsub.f32 0.0, %v688
        %v721 = vsub.f32 0.0, %v689
        %v722 = vsub.f32 0.0, %v690
        %v723 = vsub.f32 0.0, %v691
        %v724 = vsub.f32 0.0, %v692
        %v725 = vsub.f32 0.0, %v693
        %v726 = vsub.f32 0.0, %v694
        %v727 = vsub.f32 0.0, %v695
        %v728 = vsub.f32 0.0, %v696
        %v729 = vsub.f32 0.0, %v697
        %v730 = vsub.f32 0.0, %v698
        %v731 = vsub.f32 0.0, %v699
        %v732 = vsub.f32 0.0, %v700
        %v733 = vsub.f32 0.0, %v701
        %v734 = vsub.f32 0.0, %v702
        %v735 = vsub.f32 0.0, %v703
        %v736 = vsub.f32 0.0, %v704
        %v737 = vsub.f32 0.0, %v705
        %v738 = vsub.f32 0.0, %v706
        %v739 = vsub.f32 0.0, %v707
        %v740 = vsub.f32 0.0, %v708
        %v741 = vsub.f32 0.0, %v709
        %v742 = vsub.f32 0.0, %v710
        %v743 = vsub.f32 0.0, %v711
        %v744 = vsub.f32 0.0, %v712
        %v745 = vsub.f32 0.0, %v713
        %v746 = vmul.f32 %v714, 1.442695
        %v747 = vpow.pop %v746
        %v748 = vmul.f32 %v715, 1.442695
        %v749 = vpow.pop %v748
        %v750 = vmul.f32 %v716, 1.442695
        %v751 = vpow.pop %v750
        %v752 = vmul.f32 %v717, 1.442695
        %v753 = vpow.pop %v752
        %v754 = vmul.f32 %v718, 1.442695
        %v755 = vpow.pop %v754
        %v756 = vmul.f32 %v719, 1.442695
        %v757 = vpow.pop %v756
        %v758 = vmul.f32 %v720, 1.442695
        %v759 = vpow.pop %v758
        %v760 = vmul.f32 %v721, 1.442695
        %v761 = vpow.pop %v760
        %v762 = vmul.f32 %v722, 1.442695
        %v763 = vpow.pop %v762
        %v764 = vmul.f32 %v723, 1.442695
        %v765 = vpow.pop %v764
        %v766 = vmul.f32 %v724, 1.442695
        %v767 = vpow.pop %v766
        %v768 = vmul.f32 %v725, 1.442695
        %v769 = vpow.pop %v768
        %v770 = vmul.f32 %v726, 1.442695
        %v771 = vpow.pop %v770
        %v772 = vmul.f32 %v727, 1.442695
        %v773 = vpow.pop %v772
        %v774 = vmul.f32 %v728, 1.442695
        %v775 = vpow.pop %v774
        %v776 = vmul.f32 %v729, 1.442695
        %v777 = vpow.pop %v776
        %v778 = vmul.f32 %v730, 1.442695
        %v779 = vpow.pop %v778
        %v780 = vmul.f32 %v731, 1.442695
        %v781 = vpow.pop %v780
        %v782 = vmul.f32 %v732, 1.442695
        %v783 = vpow.pop %v782
        %v784 = vmul.f32 %v733, 1.442695
        %v785 = vpow.pop %v784
        %v786 = vmul.f32 %v734, 1.442695
        %v787 = vpow.pop %v786
        %v788 = vmul.f32 %v735, 1.442695
        %v789 = vpow.pop %v788
        %v790 = vmul.f32 %v736, 1.442695
        %v791 = vpow.pop %v790
        %v792 = vmul.f32 %v737, 1.442695
        %v793 = vpow.pop %v792
        %v794 = vmul.f32 %v738, 1.442695
        %v795 = vpow.pop %v794
        %v796 = vmul.f32 %v739, 1.442695
        %v797 = vpow.pop %v796
        %v798 = vmul.f32 %v740, 1.442695
        %v799 = vpow.pop %v798
        %v800 = vmul.f32 %v741, 1.442695
        %v801 = vpow.pop %v800
        %v802 = vmul.f32 %v742, 1.442695
        %v803 = vpow.pop %v802
        %v804 = vmul.f32 %v743, 1.442695
        %v805 = vpow.pop %v804
        %v806 = vmul.f32 %v744, 1.442695
        %v807 = vpow.pop %v806
        %v808 = vmul.f32 %v745, 1.442695
        %v809 = vpow.pop %v808
        %v810 = vadd.f32 %v747, 1.0
        %v811 = vadd.f32 %v749, 1.0
        %v812 = vadd.f32 %v751, 1.0
        %v813 = vadd.f32 %v753, 1.0
        %v814 = vadd.f32 %v755, 1.0
        %v815 = vadd.f32 %v757, 1.0
        %v816 = vadd.f32 %v759, 1.0
        %v817 = vadd.f32 %v761, 1.0
        %v818 = vadd.f32 %v763, 1.0
        %v819 = vadd.f32 %v765, 1.0
        %v820 = vadd.f32 %v767, 1.0
        %v821 = vadd.f32 %v769, 1.0
        %v822 = vadd.f32 %v771, 1.0
        %v823 = vadd.f32 %v773, 1.0
        %v824 = vadd.f32 %v775, 1.0
        %v825 = vadd.f32 %v777, 1.0
        %v826 = vadd.f32 %v779, 1.0
        %v827 = vadd.f32 %v781, 1.0
        %v828 = vadd.f32 %v783, 1.0
        %v829 = vadd.f32 %v785, 1.0
        %v830 = vadd.f32 %v787, 1.0
        %v831 = vadd.f32 %v789, 1.0
        %v832 = vadd.f32 %v791, 1.0
        %v833 = vadd.f32 %v793, 1.0
        %v834 = vadd.f32 %v795, 1.0
        %v835 = vadd.f32 %v797, 1.0
        %v836 = vadd.f32 %v799, 1.0
        %v837 = vadd.f32 %v801, 1.0
        %v838 = vadd.f32 %v803, 1.0
        %v839 = vadd.f32 %v805, 1.0
        %v840 = vadd.f32 %v807, 1.0
        %v841 = vadd.f32 %v809, 1.0
        %v842 = vrcp.pop %v810
        %v843 = vrcp.pop %v811
        %v844 = vrcp.pop %v812
        %v845 = vrcp.pop %v813
        %v846 = vrcp.pop %v814
        %v847 = vrcp.pop %v815
        %v848 = vrcp.pop %v816
        %v849 = vrcp.pop %v817
        %v850 = vrcp.pop %v818
        %v851 = vrcp.pop %v819
        %v852 = vrcp.pop %v820
        %v853 = vrcp.pop %v821
        %v854 = vrcp.pop %v822
        %v855 = vrcp.pop %v823
        %v856 = vrcp.pop %v824
        %v857 = vrcp.pop %v825
        %v858 = vrcp.pop %v826
        %v859 = vrcp.pop %v827
        %v860 = vrcp.pop %v828
        %v861 = vrcp.pop %v829
        %v862 = vrcp.pop %v830
        %v863 = vrcp.pop %v831
        %v864 = vrcp.pop %v832
        %v865 = vrcp.pop %v833
        %v866 = vrcp.pop %v834
        %v867 = vrcp.pop %v835
        %v868 = vrcp.pop %v836
        %v869 = vrcp.pop %v837
        %v870 = vrcp.pop %v838
        %v871 = vrcp.pop %v839
        %v872 = vrcp.pop %v840
        %v873 = vrcp.pop %v841
        %v874 = vmul.f32 %v682, %v842
        %v875 = vmul.f32 %v683, %v843
        %v876 = vmul.f32 %v684, %v844
        %v877 = vmul.f32 %v685, %v845
        %v878 = vmul.f32 %v686, %v846
        %v879 = vmul.f32 %v687, %v847
        %v880 = vmul.f32 %v688, %v848
        %v881 = vmul.f32 %v689, %v849
        %v882 = vmul.f32 %v690, %v850
        %v883 = vmul.f32 %v691, %v851
        %v884 = vmul.f32 %v692, %v852
        %v885 = vmul.f32 %v693, %v853
        %v886 = vmul.f32 %v694, %v854
        %v887 = vmul.f32 %v695, %v855
        %v888 = vmul.f32 %v696, %v856
        %v889 = vmul.f32 %v697, %v857
        %v890 = vmul.f32 %v698, %v858
        %v891 = vmul.f32 %v699, %v859
        %v892 = vmul.f32 %v700, %v860
        %v893 = vmul.f32 %v701, %v861
        %v894 = vmul.f32 %v702, %v862
        %v895 = vmul.f32 %v703, %v863
        %v896 = vmul.f32 %v704, %v864
        %v897 = vmul.f32 %v705, %v865
        %v898 = vmul.f32 %v706, %v866
        %v899 = vmul.f32 %v707, %v867
        %v900 = vmul.f32 %v708, %v868
        %v901 = vmul.f32 %v709, %v869
        %v902 = vmul.f32 %v710, %v870
        %v903 = vmul.f32 %v711, %v871
        %v904 = vmul.f32 %v712, %v872
        %v905 = vmul.f32 %v713, %v873
        %906 = vst [vmem:[%s273] sm:$0xff] %v874
        %907 = vst [vmem:[%s273 + $0x8] sm:$0xff] %v875
        %908 = vst [vmem:[%s273 + $0x10] sm:$0xff] %v876
        %909 = vst [vmem:[%s273 + $0x18] sm:$0xff] %v877
        %910 = vst [vmem:[%s273 + $0x20] sm:$0xff] %v878
        %911 = vst [vmem:[%s273 + $0x28] sm:$0xff] %v879
        %912 = vst [vmem:[%s273 + $0x30] sm:$0xff] %v880
        %913 = vst [vmem:[%s273 + $0x38] sm:$0xff] %v881
        %914 = vst [vmem:[%s273 + $0x40] sm:$0xff] %v882
        %915 = vst [vmem:[%s273 + $0x48] sm:$0xff] %v883
        %916 = vst [vmem:[%s273 + $0x50] sm:$0xff] %v884
        %917 = vst [vmem:[%s273 + $0x58] sm:$0xff] %v885
        %918 = vst [vmem:[%s273 + $0x60] sm:$0xff] %v886
        %919 = vst [vmem:[%s273 + $0x68] sm:$0xff] %v887
        %920 = vst [vmem:[%s273 + $0x70] sm:$0xff] %v888
        %921 = vst [vmem:[%s273 + $0x78] sm:$0xff] %v889
        %922 = vst [vmem:[%s273 + $0x80] sm:$0xff] %v890
        %923 = vst [vmem:[%s273 + $0x88] sm:$0xff] %v891
        %924 = vst [vmem:[%s273 + $0x90] sm:$0xff] %v892
        %925 = vst [vmem:[%s273 + $0x98] sm:$0xff] %v893
        %926 = vst [vmem:[%s273 + $0xa0] sm:$0xff] %v894
        %927 = vst [vmem:[%s273 + $0xa8] sm:$0xff] %v895
        %928 = vst [vmem:[%s273 + $0xb0] sm:$0xff] %v896
        %929 = vst [vmem:[%s273 + $0xb8] sm:$0xff] %v897
        %930 = vst [vmem:[%s273 + $0xc0] sm:$0xff] %v898
        %931 = vst [vmem:[%s273 + $0xc8] sm:$0xff] %v899
        %932 = vst [vmem:[%s273 + $0xd0] sm:$0xff] %v900
        %933 = vst [vmem:[%s273 + $0xd8] sm:$0xff] %v901
        %934 = vst [vmem:[%s273 + $0xe0] sm:$0xff] %v902
        %935 = vst [vmem:[%s273 + $0xe8] sm:$0xff] %v903
        %936 = vst [vmem:[%s273 + $0xf0] sm:$0xff] %v904
        %937 = vst [vmem:[%s273 + $0xf8] sm:$0xff] %v905
        %s938 = sand.u32 %s148, 1
        %s939 = scalar_lea.sflag [#allocation4], %s938
        %s940 = sand.u32 %s148, 1
        %s941 = smul.addr %s940, 256
        %s942 = scalar_lea.vmem [#allocation7], %s941
        // Predicated region
        $region45: #{tpu_custom_call.1} parent=35 // pred_check
          %p943 = pneg %p158
        $region46: #{tpu_custom_call.1} parent=35 // pred_check_branch
          %945 = sbr.rel (%p943) target = $region48
        $region47: #{tpu_custom_call.1} parent=35 // pred_region
          %s946 = smul.u32 32, %s26
          %s948 = ssub.s32 4096, 4096
          %949 = vsyncadd %s939, %s948
          %s950 = sadd.s32 %s27, %s946
          %s951 = smul.addr %s950, 128
          %s952 = scalar_lea.hbm %s4, %s951
          %s953 = sshll.u32 %s942, 4
          %s954 = int_to_ptr.vmem [resolvable:$true] %s953
          %959 = dma.vmem_to_hbm [thread:$0]  %s954, 4096, %s952, %s939, 128, 128, 8
        $region48: #{tpu_custom_call.1} parent=35 // pred_fallthru
          _
      $region36: #{tpu_custom_call.1} parent=5 // pred_fallthru
        _
      %p960 = scmp.le.s32.totalorder 2, %s17
      // Predicated region
      $region49: #{tpu_custom_call.1} parent=5 // pred_check
        %p961 = pneg %p960
      $region50: #{tpu_custom_call.1} parent=5 // pred_check_branch
        %963 = sbr.rel (%p961) target = $region52
      $region51: #{tpu_custom_call.1} parent=5 // pred_region
        %s964 = ssub.s32 %s17, 2
        // Predicated region
        $region53: #{tpu_custom_call.1} parent=51 // pred_check
          %p965 = pneg %p164
        $region54: #{tpu_custom_call.1} parent=51 // pred_check_branch
          %967 = sbr.rel (%p965) target = $region56
        $region55: #{tpu_custom_call.1} parent=51 // pred_region
          %s968 = sand.u32 %s149, 1
          %s969 = scalar_lea.sflag [#allocation4], %s968
          %s970 = sand.u32 %s149, 1
          %s971 = smul.addr %s970, 256
          %s972 = scalar_lea.vmem [#allocation7], %s971
          %973 = dma.done %s969, 4096
        $region56: #{tpu_custom_call.1} parent=51 // pred_fallthru
          _
      $region52: #{tpu_custom_call.1} parent=5 // pred_fallthru
        _
    $region6: #{tpu_custom_call.1} parent=1 // loop_footer
      %s21 = sadd.s32 1, %s17
    $region7: #{tpu_custom_call.1} parent=1 // loop_footer_branch
      %16 = sbr.rel target = $region3
    $region8: #{tpu_custom_call.1} parent=1 // loop_exit
      _
    %974 = vsyncpa [#allocation3], 1
    %s975 = scalar_lea.sflag [#allocation3], 1
    %976 = vsyncpa %s975, 1
    %977 = vsyncpa [#allocation6], 1
    %978 = vsyncpa [#allocation4], 1
    %s979 = scalar_lea.sflag [#allocation4], 1
    %980 = vsyncpa %s979, 1

</llo_original>
